<compile_context>
chip_gen: v5e
topology: v5e:2x2
jax: 0.10.0
libtpu: 0.0.40
codegen_flags: <defaults>
</compile_context>

<pallas_src>
import functools

import jax
import jax.numpy as jnp
from jax.experimental import pallas as pl
from jax.experimental.pallas import tpu as pltpu

HIDDEN = 128    # hidden_size (lane-aligned small stand-in for 1000)
VOCAB = 256     # output_size
SEQ = 8         # decode steps fused into one pallas_call
N_LAYERS = 1    # module default


def decoder_rnn_kernel(n_layers, H,
                       tok_ref,    # SMEM (T,) int32   : scalar-prefetched tokens
                       hin_ref,    # VMEM (1, H)  f32  : initial hidden state
                       emb_ref,    # VMEM (1, H)  bf16 : embedding row for this step
                       w_ref,      # VMEM (2H,4H) bf16 : packed GRU weights (r|z|n_i|n_h)
                       b_ref,      # VMEM (1, 4H) f32  : packed GRU biases
                       wout_ref,   # VMEM (H, V)  bf16 : out Linear W^T
                       bout_ref,   # VMEM (1, V)  f32
                       logp_ref,   # VMEM (1, V)  f32 out : per-step log-probs
                       hout_ref,   # VMEM (1, H)  f32 out : final hidden state
                       h_scr):     # VMEM (1, H)  f32 scratch : recurrent carry
    t = pl.program_id(0)

    @pl.when(t == 0)
    def _init():
        h_scr[...] = hin_ref[...]

    # embedding row was gathered by the BlockSpec index_map (scalar prefetch)
    out = emb_ref[...].astype(jnp.float32)            # (1, H)
    h = h_scr[...]                                    # (1, H)

    for _ in range(n_layers):
        out = jnp.maximum(out, 0.0)                   # F.relu
        # fused GRU step: [relu(out), h] @ [[Wih_r|Wih_z|Wih_n|0],[Whh_r|Whh_z|0|Whh_n]]
        x = jnp.concatenate([out, h], axis=-1).astype(jnp.bfloat16)      # (1, 2H)
        g = jnp.dot(x, w_ref[...],
                    preferred_element_type=jnp.float32) + b_ref[...]     # (1, 4H)
        r = jax.nn.sigmoid(g[:, 0:H])
        z = jax.nn.sigmoid(g[:, H:2 * H])
        n = jnp.tanh(g[:, 2 * H:3 * H] + r * g[:, 3 * H:4 * H])
        h = (1.0 - z) * n + z * h
        out = h                                       # GRU output == new hidden

    h_scr[...] = h
    hout_ref[...] = h

    # log_softmax(out @ W_out^T + b_out) over the vocab dim
    logits = jnp.dot(h.astype(jnp.bfloat16), wout_ref[...],
                     preferred_element_type=jnp.float32) + bout_ref[...]  # (1, V)
    m = jnp.max(logits, axis=-1, keepdims=True)
    lse = m + jnp.log(jnp.sum(jnp.exp(logits - m), axis=-1, keepdims=True))
    logp_ref[...] = logits - lse


def prepare_params(raw_params):
    """Pack / transpose / cast PyTorch-layout params for the kernel."""
    emb, w_ih, w_hh, b_ih, b_hh, w_out, b_out = raw_params
    V, H = emb.shape
    Wir, Wiz, Win = w_ih[0:H].T, w_ih[H:2 * H].T, w_ih[2 * H:3 * H].T
    Whr, Whz, Whn = w_hh[0:H].T, w_hh[H:2 * H].T, w_hh[2 * H:3 * H].T
    Z = jnp.zeros((H, H), jnp.float32)
    w_packed = jnp.concatenate(
        [jnp.concatenate([Wir, Wiz, Win, Z], axis=1),
         jnp.concatenate([Whr, Whz, Z, Whn], axis=1)], axis=0)           # (2H, 4H)
    b_packed = jnp.concatenate(
        [b_ih[0:H] + b_hh[0:H], b_ih[H:2 * H] + b_hh[H:2 * H],
         b_ih[2 * H:3 * H], b_hh[2 * H:3 * H]]).reshape(1, 4 * H)        # (1, 4H)
    return (emb.astype(jnp.bfloat16).reshape(V, 1, H),   # 3D so the (1,1,H) row block is legal
            w_packed.astype(jnp.bfloat16),
            b_packed.astype(jnp.float32),
            w_out.T.astype(jnp.bfloat16),                 # (H, V)
            b_out.reshape(1, V).astype(jnp.float32))


def decoder_rnn_forward(tokens, hidden, kparams, n_layers=N_LAYERS):
    """Teacher-forced decode of T tokens in one pallas_call.

    tokens: int32 (T,); hidden: f32 (1, 1, H).
    Returns (log_probs (T, V), final hidden (1, 1, H)).  T=1 == module forward.
    """
    emb3, w_packed, b_packed, wout_t, bout = kparams
    V, _, H = emb3.shape
    T = int(tokens.shape[0])
    tokens = jnp.clip(tokens.astype(jnp.int32), 0, V - 1)   # bounds-safe gather
    h0 = hidden.reshape(1, H).astype(jnp.float32)

    kernel = functools.partial(decoder_rnn_kernel, n_layers, H)
    grid_spec = pltpu.PrefetchScalarGridSpec(
        num_scalar_prefetch=1,
        grid=(T,),
        in_specs=[
            pl.BlockSpec((1, H), lambda t, tok: (0, 0)),                   # h0 (read once)
            pl.BlockSpec((None, 1, H), lambda t, tok: (tok[t], 0, 0)),     # emb row gather
            pl.BlockSpec((2 * H, 4 * H), lambda t, tok: (0, 0)),           # GRU W (resident)
            pl.BlockSpec((1, 4 * H), lambda t, tok: (0, 0)),               # GRU b (resident)
            pl.BlockSpec((H, V), lambda t, tok: (0, 0)),                   # out W (resident)
            pl.BlockSpec((1, V), lambda t, tok: (0, 0)),                   # out b (resident)
        ],
        out_specs=(
            pl.BlockSpec((None, 1, V), lambda t, tok: (t, 0, 0)),          # per-step log-probs
            pl.BlockSpec((1, H), lambda t, tok: (0, 0)),                   # final hidden
        ),
        scratch_shapes=[pltpu.VMEM((1, H), jnp.float32)],
    )
    logp3, h_out = pl.pallas_call(
        kernel,
        grid_spec=grid_spec,
        out_shape=(jax.ShapeDtypeStruct((T, 1, V), jnp.float32),
                   jax.ShapeDtypeStruct((1, H), jnp.float32)),
        input_output_aliases={1: 1},   # h0 input buffer -> final-hidden output
        compiler_params=pltpu.CompilerParams(
            dimension_semantics=("arbitrary",)),   # recurrence => sequential grid
    )(tokens, h0, emb3, w_packed, b_packed, wout_t, bout)
    return logp3.reshape(T, V), h_out.reshape(1, 1, H)


def decoder_rnn_step(token, hidden, kparams, n_layers=N_LAYERS):
    """Exact DecoderRNN.forward semantics: one token -> (log_probs (1,V), hidden (1,1,H))."""
    return decoder_rnn_forward(token.reshape(1), hidden, kparams, n_layers)


def init_params(key, hidden_size, output_size):
    """Deterministic init with the PyTorch parameter shapes / gate order (r, z, n)."""
    ks = jax.random.split(key, 7)
    s = 1.0 / (hidden_size ** 0.5)
    emb = jax.random.normal(ks[0], (output_size, hidden_size), jnp.float32)
    w_ih = jax.random.uniform(ks[1], (3 * hidden_size, hidden_size), jnp.float32, -s, s)
    w_hh = jax.random.uniform(ks[2], (3 * hidden_size, hidden_size), jnp.float32, -s, s)
    b_ih = jax.random.uniform(ks[3], (3 * hidden_size,), jnp.float32, -s, s)
    b_hh = jax.random.uniform(ks[4], (3 * hidden_size,), jnp.float32, -s, s)
    w_out = jax.random.uniform(ks[5], (output_size, hidden_size), jnp.float32, -s, s)
    b_out = jax.random.uniform(ks[6], (output_size,), jnp.float32, -s, s)
    return (emb, w_ih, w_hh, b_ih, b_hh, w_out, b_out)


def reference_forward(tokens, hidden, raw_params, n_layers=N_LAYERS):
    """Pure-JAX reference with matching bf16-weight / f32-accumulation numerics."""
    emb, w_ih, w_hh, b_ih, b_hh, w_out, b_out = raw_params
    H = emb.shape[1]
    emb_b = emb.astype(jnp.bfloat16)
    wih_t = w_ih.T.astype(jnp.bfloat16)
    whh_t = w_hh.T.astype(jnp.bfloat16)
    wout_t = w_out.T.astype(jnp.bfloat16)
    h = hidden.reshape(1, H).astype(jnp.float32)
    logps = []
    for t in range(int(tokens.shape[0])):
        out = emb_b[tokens[t]].astype(jnp.float32).reshape(1, H)
        for _ in range(n_layers):
            out = jnp.maximum(out, 0.0)
            gi = jnp.dot(out.astype(jnp.bfloat16), wih_t,
                         preferred_element_type=jnp.float32) + b_ih
            gh = jnp.dot(h.astype(jnp.bfloat16), whh_t,
                         preferred_element_type=jnp.float32) + b_hh
            r = jax.nn.sigmoid(gi[:, 0:H] + gh[:, 0:H])
            z = jax.nn.sigmoid(gi[:, H:2 * H] + gh[:, H:2 * H])
            n = jnp.tanh(gi[:, 2 * H:3 * H] + r * gh[:, 2 * H:3 * H])
            h = (1.0 - z) * n + z * h
            out = h
        logits = jnp.dot(out.astype(jnp.bfloat16), wout_t,
                         preferred_element_type=jnp.float32) + b_out
        logps.append(jax.nn.log_softmax(logits, axis=-1))
    return jnp.concatenate(logps, axis=0), h.reshape(1, 1, H)


if __name__ == "__main__":
    key = jax.random.PRNGKey(0)
    raw_params = init_params(key, HIDDEN, VOCAB)
    kparams = prepare_params(raw_params)

    hidden0 = jnp.zeros((1, 1, HIDDEN), dtype=jnp.float32)   # initHidden()

    # --- single step (exact module forward semantics) ---
    token = jnp.array([3], dtype=jnp.int32)
    ref_lp1, ref_h1 = reference_forward(token, hidden0, raw_params)
    lp1, h1 = decoder_rnn_step(token, hidden0, kparams)
    jax.block_until_ready((lp1, h1))
    assert lp1.shape == (1, VOCAB) and h1.shape == (1, 1, HIDDEN)
    assert jnp.allclose(lp1, ref_lp1, atol=1e-3, rtol=1e-3)
    assert jnp.allclose(h1, ref_h1, atol=1e-3, rtol=1e-3)

    # --- T decode steps fused into one kernel launch ---
    tokens = jax.random.randint(jax.random.PRNGKey(1), (SEQ,), 0, VOCAB, dtype=jnp.int32)
    ref_lp, ref_h = reference_forward(tokens, hidden0, raw_params)
    lp, h = decoder_rnn_forward(tokens, hidden0, kparams)
    jax.block_until_ready((lp, h))
    assert lp.shape == (SEQ, VOCAB) and h.shape == (1, 1, HIDDEN)
    assert jnp.allclose(lp, ref_lp, atol=1e-3, rtol=1e-3)
    assert jnp.allclose(h, ref_h, atol=1e-3, rtol=1e-3)

    print("KERNEL_OK")
</pallas_src>

<mosaic_0001>
module attributes {stable_mosaic.version = 11 : i64} {
  func.func @decoder_rnn_kernel(%arg0: i32, %arg1: memref<1xi32, #tpu.memory_space<smem>>, %arg2: memref<1x128xf32, #tpu.memory_space<vmem>>, %arg3: memref<1x1x128xbf16, #tpu.memory_space<vmem>>, %arg4: memref<256x512xbf16, #tpu.memory_space<vmem>>, %arg5: memref<1x512xf32, #tpu.memory_space<vmem>>, %arg6: memref<128x256xbf16, #tpu.memory_space<vmem>>, %arg7: memref<1x256xf32, #tpu.memory_space<vmem>>, %arg8: memref<1x1x256xf32, #tpu.memory_space<vmem>>, %arg9: memref<1x128xf32, #tpu.memory_space<vmem>>, %arg10: memref<1x128xf32, #tpu.memory_space<vmem>>) attributes {dimension_semantics = [#tpu.dimension_semantics<arbitrary>], iteration_bounds = array<i64: 1>, scalar_prefetch = 1 : i64, scratch_operands = 1 : i64, tpu.core_type = #tpu.core_type<tc>, window_params = [{pipeline_mode = #tpu.pipeline_mode<synchronous>, transform_indices = @transform_0, window_bounds = array<i64: 1, 128>}, {transform_indices = @transform_1, window_bounds = array<i64: 1, 1, 128>}, {pipeline_mode = #tpu.pipeline_mode<synchronous>, transform_indices = @transform_2, window_bounds = array<i64: 256, 512>}, {pipeline_mode = #tpu.pipeline_mode<synchronous>, transform_indices = @transform_3, window_bounds = array<i64: 1, 512>}, {pipeline_mode = #tpu.pipeline_mode<synchronous>, transform_indices = @transform_4, window_bounds = array<i64: 128, 256>}, {pipeline_mode = #tpu.pipeline_mode<synchronous>, transform_indices = @transform_5, window_bounds = array<i64: 1, 256>}, {transform_indices = @transform_6, window_bounds = array<i64: 1, 1, 256>}, {pipeline_mode = #tpu.pipeline_mode<synchronous>, transform_indices = @transform_7, window_bounds = array<i64: 1, 128>}]} {
    %c0_i32 = arith.constant 0 : i32
    %0 = arith.cmpi eq, %arg0, %c0_i32 : i32
    %1 = arith.extui %0 : i1 to i32
    %c0_i32_0 = arith.constant 0 : i32
    %2 = arith.cmpi ne, %1, %c0_i32_0 : i32
    scf.if %2 {
      %c0_27 = arith.constant 0 : index
      %c0_28 = arith.constant 0 : index
      %58 = vector.load %arg2[%c0_27, %c0_28] : memref<1x128xf32, #tpu.memory_space<vmem>>, vector<1x128xf32>
      %c0_29 = arith.constant 0 : index
      %c0_30 = arith.constant 0 : index
      %59 = vector.load %arg10[%c0_29, %c0_30] : memref<1x128xf32, #tpu.memory_space<vmem>>, vector<1x128xf32>
      tpu.vector_store %arg10[%c0_29, %c0_30], %58 {strides = array<i32>} : memref<1x128xf32, #tpu.memory_space<vmem>>, vector<1x128xf32>,
    } else {
    }
    %c0 = arith.constant 0 : index
    %c0_1 = arith.constant 0 : index
    %c0_2 = arith.constant 0 : index
    %3 = vector.load %arg3[%c0, %c0_1, %c0_2] : memref<1x1x128xbf16, #tpu.memory_space<vmem>>, vector<1x1x128xbf16>
    %4 = vector.shape_cast %3 : vector<1x1x128xbf16> to vector<1x128xbf16>
    %5 = arith.extf %4 : vector<1x128xbf16> to vector<1x128xf32>
    %c0_3 = arith.constant 0 : index
    %c0_4 = arith.constant 0 : index
    %6 = vector.load %arg10[%c0_3, %c0_4] : memref<1x128xf32, #tpu.memory_space<vmem>>, vector<1x128xf32>
    %cst = arith.constant 0.000000e+00 : f32
    %7 = vector.broadcast %cst : f32 to vector<1x128xf32>
    %8 = arith.maximumf %5, %7 : vector<1x128xf32>
    %9 = tpu.concatenate %8, %6 in 1 : vector<1x128xf32>, vector<1x128xf32> -> vector<1x256xf32>
    %10 = arith.truncf %9 : vector<1x256xf32> to vector<1x256xbf16>
    %c0_5 = arith.constant 0 : index
    %c0_6 = arith.constant 0 : index
    %11 = vector.load %arg4[%c0_5, %c0_6] : memref<256x512xbf16, #tpu.memory_space<vmem>>, vector<256x512xbf16>
    %cst_7 = arith.constant dense<0.000000e+00> : vector<1x512xf32>
    %12 = tpu.matmul %10, %11, %cst_7 {dimension_numbers = #tpu.dot_dimension_numbers<[1], [0], [0], [1], [0, 0, 1, 1], [], []>} : vector<1x256xbf16>, vector<256x512xbf16>, vector<1x512xf32> -> vector<1x512xf32>
    %c0_8 = arith.constant 0 : index
    %c0_9 = arith.constant 0 : index
    %13 = vector.load %arg5[%c0_8, %c0_9] : memref<1x512xf32, #tpu.memory_space<vmem>>, vector<1x512xf32>
    %14 = arith.addf %12, %13 : vector<1x512xf32>
    %15 = vector.extract_strided_slice %14 {offsets = [0, 0], sizes = [1, 128], strides = [1, 1]} : vector<1x512xf32> to vector<1x128xf32>
    %16 = arith.negf %15 : vector<1x128xf32>
    %17 = math.exp %16 : vector<1x128xf32>
    %cst_10 = arith.constant 1.000000e+00 : f32
    %18 = vector.broadcast %cst_10 : f32 to vector<1x128xf32>
    %19 = arith.addf %18, %17 : vector<1x128xf32>
    %20 = arith.divf %18, %19 : vector<1x128xf32>
    %21 = vector.extract_strided_slice %14 {offsets = [0, 128], sizes = [1, 128], strides = [1, 1]} : vector<1x512xf32> to vector<1x128xf32>
    %22 = arith.negf %21 : vector<1x128xf32>
    %23 = math.exp %22 : vector<1x128xf32>
    %cst_11 = arith.constant 1.000000e+00 : f32
    %24 = vector.broadcast %cst_11 : f32 to vector<1x128xf32>
    %25 = arith.addf %24, %23 : vector<1x128xf32>
    %26 = arith.divf %24, %25 : vector<1x128xf32>
    %27 = vector.extract_strided_slice %14 {offsets = [0, 256], sizes = [1, 128], strides = [1, 1]} : vector<1x512xf32> to vector<1x128xf32>
    %28 = vector.extract_strided_slice %14 {offsets = [0, 384], sizes = [1, 128], strides = [1, 1]} : vector<1x512xf32> to vector<1x128xf32>
    %29 = arith.mulf %20, %28 : vector<1x128xf32>
    %30 = arith.addf %27, %29 : vector<1x128xf32>
    %31 = math.tanh %30 : vector<1x128xf32>
    %cst_12 = arith.constant 1.000000e+00 : f32
    %32 = vector.broadcast %cst_12 : f32 to vector<1x128xf32>
    %33 = arith.subf %32, %26 : vector<1x128xf32>
    %34 = arith.mulf %33, %31 : vector<1x128xf32>
    %35 = arith.mulf %26, %6 : vector<1x128xf32>
    %36 = arith.addf %34, %35 : vector<1x128xf32>
    %c0_13 = arith.constant 0 : index
    %c0_14 = arith.constant 0 : index
    %37 = vector.load %arg10[%c0_13, %c0_14] : memref<1x128xf32, #tpu.memory_space<vmem>>, vector<1x128xf32>
    tpu.vector_store %arg10[%c0_13, %c0_14], %36 {strides = array<i32>} : memref<1x128xf32, #tpu.memory_space<vmem>>, vector<1x128xf32>,
    %c0_15 = arith.constant 0 : index
    %c0_16 = arith.constant 0 : index
    %38 = vector.load %arg9[%c0_15, %c0_16] : memref<1x128xf32, #tpu.memory_space<vmem>>, vector<1x128xf32>
    tpu.vector_store %arg9[%c0_15, %c0_16], %36 {strides = array<i32>} : memref<1x128xf32, #tpu.memory_space<vmem>>, vector<1x128xf32>,
    %39 = arith.truncf %36 : vector<1x128xf32> to vector<1x128xbf16>
    %c0_17 = arith.constant 0 : index
    %c0_18 = arith.constant 0 : index
    %40 = vector.load %arg6[%c0_17, %c0_18] : memref<128x256xbf16, #tpu.memory_space<vmem>>, vector<128x256xbf16>
    %cst_19 = arith.constant dense<0.000000e+00> : vector<1x256xf32>
    %41 = tpu.matmul %39, %40, %cst_19 {dimension_numbers = #tpu.dot_dimension_numbers<[1], [0], [0], [1], [0, 0, 1, 1], [], []>} : vector<1x128xbf16>, vector<128x256xbf16>, vector<1x256xf32> -> vector<1x256xf32>
    %c0_20 = arith.constant 0 : index
    %c0_21 = arith.constant 0 : index
    %42 = vector.load %arg7[%c0_20, %c0_21] : memref<1x256xf32, #tpu.memory_space<vmem>>, vector<1x256xf32>
    %43 = arith.addf %41, %42 : vector<1x256xf32>
    %cst_22 = arith.constant dense<0xFF800000> : vector<1xf32>
    %44 = vector.multi_reduction <maximumf>, %43, %cst_22 [1] : vector<1x256xf32> to vector<1xf32>
    %45 = vector.shape_cast %44 : vector<1xf32> to vector<1x1xf32>
    %46 = vector.broadcast %45 : vector<1x1xf32> to vector<1x256xf32>
    %47 = arith.subf %43, %46 : vector<1x256xf32>
    %48 = math.exp %47 : vector<1x256xf32>
    %cst_23 = arith.constant dense<0.000000e+00> : vector<1xf32>
    %49 = vector.multi_reduction <add>, %48, %cst_23 [1] : vector<1x256xf32> to vector<1xf32>
    %50 = vector.shape_cast %49 : vector<1xf32> to vector<1x1xf32>
    %51 = math.log %50 : vector<1x1xf32>
    %52 = arith.addf %45, %51 : vector<1x1xf32>
    %53 = vector.broadcast %52 : vector<1x1xf32> to vector<1x256xf32>
    %54 = arith.subf %43, %53 : vector<1x256xf32>
    %c0_24 = arith.constant 0 : index
    %c0_25 = arith.constant 0 : index
    %c0_26 = arith.constant 0 : index
    %55 = vector.load %arg8[%c0_24, %c0_25, %c0_26] : memref<1x1x256xf32, #tpu.memory_space<vmem>>, vector<1x1x256xf32>
    %56 = vector.shape_cast %55 : vector<1x1x256xf32> to vector<1x256xf32>
    %57 = vector.shape_cast %54 : vector<1x256xf32> to vector<1x1x256xf32>
    tpu.vector_store %arg8[%c0_24, %c0_25, %c0_26], %57 {strides = array<i32>} : memref<1x1x256xf32, #tpu.memory_space<vmem>>, vector<1x1x256xf32>,
    return
  }
  func.func @transform_0(%arg0: i32, %arg1: memref<1xi32, #tpu.memory_space<smem>>) -> (i32, i32) {
    %c0_i32 = arith.constant 0 : i32
    %c0_i32_0 = arith.constant 0 : i32
    %c0_i32_1 = arith.constant 0 : i32
    return %c0_i32, %c0_i32_0 : i32, i32
  }
  func.func @transform_1(%arg0: i32, %arg1: memref<1xi32, #tpu.memory_space<smem>>) -> (i32, i32, i32) {
    %0 = arith.index_cast %arg0 : i32 to index
    %1 = memref.load %arg1[%0] : memref<1xi32, #tpu.memory_space<smem>>
    %c0_i32 = arith.constant 0 : i32
    %c0_i32_0 = arith.constant 0 : i32
    %c0_i32_1 = arith.constant 0 : i32
    return %1, %c0_i32, %c0_i32_0 : i32, i32, i32
  }
  func.func @transform_2(%arg0: i32, %arg1: memref<1xi32, #tpu.memory_space<smem>>) -> (i32, i32) {
    %c0_i32 = arith.constant 0 : i32
    %c0_i32_0 = arith.constant 0 : i32
    %c0_i32_1 = arith.constant 0 : i32
    return %c0_i32, %c0_i32_0 : i32, i32
  }
  func.func @transform_3(%arg0: i32, %arg1: memref<1xi32, #tpu.memory_space<smem>>) -> (i32, i32) {
    %c0_i32 = arith.constant 0 : i32
    %c0_i32_0 = arith.constant 0 : i32
    %c0_i32_1 = arith.constant 0 : i32
    return %c0_i32, %c0_i32_0 : i32, i32
  }
  func.func @transform_4(%arg0: i32, %arg1: memref<1xi32, #tpu.memory_space<smem>>) -> (i32, i32) {
    %c0_i32 = arith.constant 0 : i32
    %c0_i32_0 = arith.constant 0 : i32
    %c0_i32_1 = arith.constant 0 : i32
    return %c0_i32, %c0_i32_0 : i32, i32
  }
  func.func @transform_5(%arg0: i32, %arg1: memref<1xi32, #tpu.memory_space<smem>>) -> (i32, i32) {
    %c0_i32 = arith.constant 0 : i32
    %c0_i32_0 = arith.constant 0 : i32
    %c0_i32_1 = arith.constant 0 : i32
    return %c0_i32, %c0_i32_0 : i32, i32
  }
  func.func @transform_6(%arg0: i32, %arg1: memref<1xi32, #tpu.memory_space<smem>>) -> (i32, i32, i32) {
    %c0_i32 = arith.constant 0 : i32
    %c0_i32_0 = arith.constant 0 : i32
    %c0_i32_1 = arith.constant 0 : i32
    return %arg0, %c0_i32, %c0_i32_0 : i32, i32, i32
  }
  func.func @transform_7(%arg0: i32, %arg1: memref<1xi32, #tpu.memory_space<smem>>) -> (i32, i32) {
    %c0_i32 = arith.constant 0 : i32
    %c0_i32_0 = arith.constant 0 : i32
    %c0_i32_1 = arith.constant 0 : i32
    return %c0_i32, %c0_i32_0 : i32, i32
  }
}

</mosaic_0001>

<llo_original>
// kernel: tpu_custom_call.1
$region0: #{tpu_custom_call.1}
  #allocation0 [shape = 'u32[]', space=smem, size = 0x4, offset = 0x4, fixed_abs, tag = 'smem constant byte address 0x4 - core index']
  #allocation1 [shape = 'u32[72,128]{1,0:T(1,128)}', space=vmem, size = 0x9000, scoped, tag = 'internal scratch']
  #allocation2 [shape = 'f32[1,128]{1,0:T(1,128)}', space=vmem, size = 0x200, scoped, tag = 'scratch operand']
  #allocation3 [shape = 's32[1]{0}', space=sflag, size = 0x4, scoped, tag = 'scoped memory for tpu_custom_call.1']
  #allocation4 [shape = 's32[1]{0:T(128)S(6)}', space=smem, size = 0x200, scoped, tag = 'prefetched SMEM operand 0']
  %s0 = inlined_call_operand.<no memory space> [shape: s32[1], index: 0, kind: input, shape index: {}]
  %s1 = inlined_call_operand.hbm [shape: f32[1,128], index: 1, kind: input, shape index: {}, may-alias: {1,8}]
  %s2 = inlined_call_operand.vmem [shape: bf16[256,1,128], index: 2, kind: input, shape index: {}]
  %s3 = inlined_call_operand.hbm [shape: bf16[256,512], index: 3, kind: input, shape index: {}]
  %s4 = inlined_call_operand.vmem [shape: f32[1,512], index: 4, kind: input, shape index: {}]
  %s5 = inlined_call_operand.vmem [shape: bf16[128,256], index: 5, kind: input, shape index: {}]
  %s6 = inlined_call_operand.vmem [shape: f32[1,256], index: 6, kind: input, shape index: {}]
  %s7 = inlined_call_operand.hbm [shape: f32[1,1,256], index: 7, kind: output, shape index: {0}]
  %s8 = inlined_call_operand.hbm [shape: f32[1,128], index: 8, kind: output, shape index: {1}, may-alias: {1,8}]
  %9 = xla_tuple %s7, %s8
  %s10 = sld [smem:[#allocation0]]
  $region54: #{tpu_custom_call.1} parent=0
    _
  %s12 = ssub.s32 1, %s10
  %s13 = scalar_select 0, %s12, %s10
  %14 = sst [smem:[#allocation4]] %s0
  $region1: #{tpu_custom_call.1} parent=0
    #allocation5 [shape = 'u8[512]{0}', space=vmem, size = 0x400, scoped, tag = 'input window, operand 1, single buffered']
    #allocation6 [shape = 's32[1]{0}', space=sflag, size = 0x4, scoped, tag = 'scoped memory for tpu_custom_call.1']
    #allocation7 [shape = 's32[1]{0}', space=sflag, size = 0x4, scoped, tag = 'scoped memory for tpu_custom_call.1']
    #allocation8 [shape = 'u8[262144]{0}', space=vmem, size = 0x40000, scoped, tag = 'input window, operand 3, single buffered']
    #allocation9 [shape = 's32[1]{0}', space=sflag, size = 0x4, scoped, tag = 'scoped memory for tpu_custom_call.1']
    #allocation10 [shape = 'u8[1024]{0}', space=vmem, size = 0x400, scoped, tag = 'output window, operand 0, single buffered']
    #allocation11 [shape = 'u8[512]{0}', space=vmem, size = 0x400, scoped, tag = 'output window, operand 1, single buffered']
    #allocation12 [shape = 's32[1]{0}', space=sflag, size = 0x4, scoped, tag = 'scoped memory for tpu_custom_call.1']
    %15 = vsyncpa [#allocation6], 0
    %16 = vsyncpa [#allocation9], 0
    %17 = vsyncpa [#allocation7], 0
    %18 = vsyncpa [#allocation12], 0
    // Predicated region
    $region2: #{tpu_custom_call.1} parent=1 // pred_check
      _
    $region3: #{tpu_custom_call.1} parent=1 // pred_check_branch
      %20 = sbr.rel (0) target = $region5
    $region4: #{tpu_custom_call.1} parent=1 // pred_region
      %22 = vsyncadd [#allocation6], 0
      %s24 = sshll.u32 %s1, 4
      %s25 = int_to_ptr.hbm [resolvable:$true] %s24
      %s26 = sshll.u32 [#allocation5], 4
      %s27 = int_to_ptr.vmem [resolvable:$true] %s26
      %29 = dma.hbm_to_vmem [thread:$0]  %s25, 16, %s27, [#allocation6]
    $region5: #{tpu_custom_call.1} parent=1 // pred_fallthru
      _
    // Predicated region
    $region6: #{tpu_custom_call.1} parent=1 // pred_check
      _
    $region7: #{tpu_custom_call.1} parent=1 // pred_check_branch
      %31 = sbr.rel (0) target = $region9
    $region8: #{tpu_custom_call.1} parent=1 // pred_region
      %s32 = sld [smem:[#allocation4]]
      %p33 = scmp.lt.s32.totalorder %s32, 255
      %s34 = scalar_select %p33, %s32, 255
      %s35 = scalar_lea.vmem %s2, %s34
      %s36 = sld [smem:[#allocation4]]
    $region9: #{tpu_custom_call.1} parent=1 // pred_fallthru
      _
    // Predicated region
    $region10: #{tpu_custom_call.1} parent=1 // pred_check
      _
    $region11: #{tpu_custom_call.1} parent=1 // pred_check_branch
      %38 = sbr.rel (0) target = $region13
    $region12: #{tpu_custom_call.1} parent=1 // pred_region
      %40 = vsyncadd [#allocation9], 0
      %s41 = sshll.u32 %s3, 4
      %s42 = int_to_ptr.hbm [resolvable:$true] %s41
      %s43 = sshll.u32 [#allocation8], 4
      %s44 = int_to_ptr.vmem [resolvable:$true] %s43
      %49 = dma.hbm_to_vmem [thread:$0]  %s42, 8192, %s44, [#allocation9], 256, 256, 16
    $region13: #{tpu_custom_call.1} parent=1 // pred_fallthru
      _
    // Predicated region
    $region14: #{tpu_custom_call.1} parent=1 // pred_check
      _
    $region15: #{tpu_custom_call.1} parent=1 // pred_check_branch
      %51 = sbr.rel (0) target = $region17
    $region16: #{tpu_custom_call.1} parent=1 // pred_region
      _
    $region17: #{tpu_custom_call.1} parent=1 // pred_fallthru
      _
    // Predicated region
    $region18: #{tpu_custom_call.1} parent=1 // pred_check
      _
    $region19: #{tpu_custom_call.1} parent=1 // pred_check_branch
      %53 = sbr.rel (0) target = $region21
    $region20: #{tpu_custom_call.1} parent=1 // pred_region
      _
    $region21: #{tpu_custom_call.1} parent=1 // pred_fallthru
      _
    // Predicated region
    $region22: #{tpu_custom_call.1} parent=1 // pred_check
      _
    $region23: #{tpu_custom_call.1} parent=1 // pred_check_branch
      %55 = sbr.rel (0) target = $region25
    $region24: #{tpu_custom_call.1} parent=1 // pred_region
      _
    $region25: #{tpu_custom_call.1} parent=1 // pred_fallthru
      _
    // Predicated region
    $region26: #{tpu_custom_call.1} parent=1 // pred_check
      _
    $region27: #{tpu_custom_call.1} parent=1 // pred_check_branch
      %57 = sbr.rel (0) target = $region29
    $region28: #{tpu_custom_call.1} parent=1 // pred_region
      %59 = dma.done [#allocation6], 16
    $region29: #{tpu_custom_call.1} parent=1 // pred_fallthru
      _
    // Predicated region
    $region30: #{tpu_custom_call.1} parent=1 // pred_check
      _
    $region31: #{tpu_custom_call.1} parent=1 // pred_check_branch
      %61 = sbr.rel (0) target = $region33
    $region32: #{tpu_custom_call.1} parent=1 // pred_region
      %63 = dma.done [#allocation9], 8192
    $region33: #{tpu_custom_call.1} parent=1 // pred_fallthru
      _
    %s64 = sld [smem:[#allocation4]]
    %p65 = scmp.lt.s32.totalorder %s64, 255
    %s66 = scalar_select %p65, %s64, 255
    %s67 = scalar_lea.vmem %s2, %s66
    %s68 = sld [smem:[#allocation4]]
    %p69 = scmp.lt.s32.totalorder %s68, 255
    %s70 = scalar_select %p69, %s68, 255
    %s71 = scalar_lea.vmem %s2, %s70
    %s72 = sld [smem:[#allocation4]]
    %p73 = scmp.eq.s32.totalorder 0, 0
    // Predicated region
    $region34: #{tpu_custom_call.1} parent=1 // pred_check
      %p74 = pneg %p73
    $region35: #{tpu_custom_call.1} parent=1 // pred_check_branch
      %76 = sbr.rel (%p74) target = $region37
    $region36: #{tpu_custom_call.1} parent=1 // pred_region
      %v77 = vld [vmem:[#allocation5] sm:$0x1]
      %78 = vst [vmem:[#allocation2] sm:$0x1] %v77
    $region37: #{tpu_custom_call.1} parent=1 // pred_fallthru
      _
    %v79 = vld [vmem:[%s71] sm:$0x1]
    %v80 = vunpack.c.l.bf16 %v79
    %v81 = vld [vmem:[#allocation2] sm:$0x1]
    %v82 = vmax.f32 %v80, 0.0
    %v83 = vpack.c.bf16 %v82, %v82
    %v84 = vpack.c.bf16 %v81, %v81
    %v85 = vld [vmem:[#allocation8] sm:$0xff]
    %v86 = vld [vmem:[#allocation8 + $0x8] sm:$0xff]
    %v87 = vld [vmem:[#allocation8 + $0x10] sm:$0xff]
    %v88 = vld [vmem:[#allocation8 + $0x18] sm:$0xff]
    %v89 = vld [vmem:[#allocation8 + $0x20] sm:$0xff]
    %v90 = vld [vmem:[#allocation8 + $0x28] sm:$0xff]
    %v91 = vld [vmem:[#allocation8 + $0x30] sm:$0xff]
    %v92 = vld [vmem:[#allocation8 + $0x38] sm:$0xff]
    %v93 = vld [vmem:[#allocation8 + $0x40] sm:$0xff]
    %v94 = vld [vmem:[#allocation8 + $0x48] sm:$0xff]
    %v95 = vld [vmem:[#allocation8 + $0x50] sm:$0xff]
    %v96 = vld [vmem:[#allocation8 + $0x58] sm:$0xff]
    %v97 = vld [vmem:[#allocation8 + $0x60] sm:$0xff]
    %v98 = vld [vmem:[#allocation8 + $0x68] sm:$0xff]
    %v99 = vld [vmem:[#allocation8 + $0x70] sm:$0xff]
    %v100 = vld [vmem:[#allocation8 + $0x78] sm:$0xff]
    %v101 = vld [vmem:[#allocation8 + $0x80] sm:$0xff]
    %v102 = vld [vmem:[#allocation8 + $0x88] sm:$0xff]
    %v103 = vld [vmem:[#allocation8 + $0x90] sm:$0xff]
    %v104 = vld [vmem:[#allocation8 + $0x98] sm:$0xff]
    %v105 = vld [vmem:[#allocation8 + $0xa0] sm:$0xff]
    %v106 = vld [vmem:[#allocation8 + $0xa8] sm:$0xff]
    %v107 = vld [vmem:[#allocation8 + $0xb0] sm:$0xff]
    %v108 = vld [vmem:[#allocation8 + $0xb8] sm:$0xff]
    %v109 = vld [vmem:[#allocation8 + $0xc0] sm:$0xff]
    %v110 = vld [vmem:[#allocation8 + $0xc8] sm:$0xff]
    %v111 = vld [vmem:[#allocation8 + $0xd0] sm:$0xff]
    %v112 = vld [vmem:[#allocation8 + $0xd8] sm:$0xff]
    %v113 = vld [vmem:[#allocation8 + $0xe0] sm:$0xff]
    %v114 = vld [vmem:[#allocation8 + $0xe8] sm:$0xff]
    %v115 = vld [vmem:[#allocation8 + $0xf0] sm:$0xff]
    %v116 = vld [vmem:[#allocation8 + $0xf8] sm:$0xff]
    %v117 = vld [vmem:[#allocation8 + $0x100] sm:$0xff]
    %v118 = vld [vmem:[#allocation8 + $0x108] sm:$0xff]
    %v119 = vld [vmem:[#allocation8 + $0x110] sm:$0xff]
    %v120 = vld [vmem:[#allocation8 + $0x118] sm:$0xff]
    %v121 = vld [vmem:[#allocation8 + $0x120] sm:$0xff]
    %v122 = vld [vmem:[#allocation8 + $0x128] sm:$0xff]
    %v123 = vld [vmem:[#allocation8 + $0x130] sm:$0xff]
    %v124 = vld [vmem:[#allocation8 + $0x138] sm:$0xff]
    %v125 = vld [vmem:[#allocation8 + $0x140] sm:$0xff]
    %v126 = vld [vmem:[#allocation8 + $0x148] sm:$0xff]
    %v127 = vld [vmem:[#allocation8 + $0x150] sm:$0xff]
    %v128 = vld [vmem:[#allocation8 + $0x158] sm:$0xff]
    %v129 = vld [vmem:[#allocation8 + $0x160] sm:$0xff]
    %v130 = vld [vmem:[#allocation8 + $0x168] sm:$0xff]
    %v131 = vld [vmem:[#allocation8 + $0x170] sm:$0xff]
    %v132 = vld [vmem:[#allocation8 + $0x178] sm:$0xff]
    %v133 = vld [vmem:[#allocation8 + $0x180] sm:$0xff]
    %v134 = vld [vmem:[#allocation8 + $0x188] sm:$0xff]
    %v135 = vld [vmem:[#allocation8 + $0x190] sm:$0xff]
    %v136 = vld [vmem:[#allocation8 + $0x198] sm:$0xff]
    %v137 = vld [vmem:[#allocation8 + $0x1a0] sm:$0xff]
    %v138 = vld [vmem:[#allocation8 + $0x1a8] sm:$0xff]
    %v139 = vld [vmem:[#allocation8 + $0x1b0] sm:$0xff]
    %v140 = vld [vmem:[#allocation8 + $0x1b8] sm:$0xff]
    %v141 = vld [vmem:[#allocation8 + $0x1c0] sm:$0xff]
    %v142 = vld [vmem:[#allocation8 + $0x1c8] sm:$0xff]
    %v143 = vld [vmem:[#allocation8 + $0x1d0] sm:$0xff]
    %v144 = vld [vmem:[#allocation8 + $0x1d8] sm:$0xff]
    %v145 = vld [vmem:[#allocation8 + $0x1e0] sm:$0xff]
    %v146 = vld [vmem:[#allocation8 + $0x1e8] sm:$0xff]
    %v147 = vld [vmem:[#allocation8 + $0x1f0] sm:$0xff]
    %v148 = vld [vmem:[#allocation8 + $0x1f8] sm:$0xff]
    %v149 = vld [vmem:[%s4] sm:$0xf]
    %v214 = vunpack.c.l.b16 %v85
    %v215 = vunpack.c.h.b16 %v85
    %v216 = vunpack.c.l.b16 %v86
    %v217 = vunpack.c.h.b16 %v86
    %v218 = vunpack.c.l.b16 %v87
    %v219 = vunpack.c.h.b16 %v87
    %v220 = vunpack.c.l.b16 %v88
    %v221 = vunpack.c.h.b16 %v88
    %v222 = vunpack.c.l.b16 %v89
    %v223 = vunpack.c.h.b16 %v89
    %v224 = vunpack.c.l.b16 %v90
    %v225 = vunpack.c.h.b16 %v90
    %v226 = vunpack.c.l.b16 %v91
    %v227 = vunpack.c.h.b16 %v91
    %v228 = vunpack.c.l.b16 %v92
    %v229 = vunpack.c.h.b16 %v92
    %v230 = vunpack.c.l.b16 %v93
    %v231 = vunpack.c.h.b16 %v93
    %v232 = vunpack.c.l.b16 %v94
    %v233 = vunpack.c.h.b16 %v94
    %v234 = vunpack.c.l.b16 %v95
    %v235 = vunpack.c.h.b16 %v95
    %v236 = vunpack.c.l.b16 %v96
    %v237 = vunpack.c.h.b16 %v96
    %v238 = vunpack.c.l.b16 %v97
    %v239 = vunpack.c.h.b16 %v97
    %v240 = vunpack.c.l.b16 %v98
    %v241 = vunpack.c.h.b16 %v98
    %v242 = vunpack.c.l.b16 %v99
    %v243 = vunpack.c.h.b16 %v99
    %v244 = vunpack.c.l.b16 %v100
    %v245 = vunpack.c.h.b16 %v100
    %v246 = vunpack.c.l.b16 %v101
    %v247 = vunpack.c.h.b16 %v101
    %v248 = vunpack.c.l.b16 %v102
    %v249 = vunpack.c.h.b16 %v102
    %v250 = vunpack.c.l.b16 %v103
    %v251 = vunpack.c.h.b16 %v103
    %v252 = vunpack.c.l.b16 %v104
    %v253 = vunpack.c.h.b16 %v104
    %v254 = vunpack.c.l.b16 %v105
    %v255 = vunpack.c.h.b16 %v105
    %v256 = vunpack.c.l.b16 %v106
    %v257 = vunpack.c.h.b16 %v106
    %v258 = vunpack.c.l.b16 %v107
    %v259 = vunpack.c.h.b16 %v107
    %v260 = vunpack.c.l.b16 %v108
    %v261 = vunpack.c.h.b16 %v108
    %v262 = vunpack.c.l.b16 %v109
    %v263 = vunpack.c.h.b16 %v109
    %v264 = vunpack.c.l.b16 %v110
    %v265 = vunpack.c.h.b16 %v110
    %v266 = vunpack.c.l.b16 %v111
    %v267 = vunpack.c.h.b16 %v111
    %v268 = vunpack.c.l.b16 %v112
    %v269 = vunpack.c.h.b16 %v112
    %v270 = vunpack.c.l.b16 %v113
    %v271 = vunpack.c.h.b16 %v113
    %v272 = vunpack.c.l.b16 %v114
    %v273 = vunpack.c.h.b16 %v114
    %v274 = vunpack.c.l.b16 %v115
    %v275 = vunpack.c.h.b16 %v115
    %v276 = vunpack.c.l.b16 %v116
    %v277 = vunpack.c.h.b16 %v116
    %v278 = vunpack.c.l.b16 %v117
    %v279 = vunpack.c.h.b16 %v117
    %v280 = vunpack.c.l.b16 %v118
    %v281 = vunpack.c.h.b16 %v118
    %v282 = vunpack.c.l.b16 %v119
    %v283 = vunpack.c.h.b16 %v119
    %v284 = vunpack.c.l.b16 %v120
    %v285 = vunpack.c.h.b16 %v120
    %v286 = vunpack.c.l.b16 %v121
    %v287 = vunpack.c.h.b16 %v121
    %v288 = vunpack.c.l.b16 %v122
    %v289 = vunpack.c.h.b16 %v122
    %v290 = vunpack.c.l.b16 %v123
    %v291 = vunpack.c.h.b16 %v123
    %v292 = vunpack.c.l.b16 %v124
    %v293 = vunpack.c.h.b16 %v124
    %v294 = vunpack.c.l.b16 %v125
    %v295 = vunpack.c.h.b16 %v125
    %v296 = vunpack.c.l.b16 %v126
    %v297 = vunpack.c.h.b16 %v126
    %v298 = vunpack.c.l.b16 %v127
    %v299 = vunpack.c.h.b16 %v127
    %v300 = vunpack.c.l.b16 %v128
    %v301 = vunpack.c.h.b16 %v128
    %v302 = vunpack.c.l.b16 %v129
    %v303 = vunpack.c.h.b16 %v129
    %v304 = vunpack.c.l.b16 %v130
    %v305 = vunpack.c.h.b16 %v130
    %v306 = vunpack.c.l.b16 %v131
    %v307 = vunpack.c.h.b16 %v131
    %v308 = vunpack.c.l.b16 %v132
    %v309 = vunpack.c.h.b16 %v132
    %v310 = vunpack.c.l.b16 %v133
    %v311 = vunpack.c.h.b16 %v133
    %v312 = vunpack.c.l.b16 %v134
    %v313 = vunpack.c.h.b16 %v134
    %v314 = vunpack.c.l.b16 %v135
    %v315 = vunpack.c.h.b16 %v135
    %v316 = vunpack.c.l.b16 %v136
    %v317 = vunpack.c.h.b16 %v136
    %v318 = vunpack.c.l.b16 %v137
    %v319 = vunpack.c.h.b16 %v137
    %v320 = vunpack.c.l.b16 %v138
    %v321 = vunpack.c.h.b16 %v138
    %v322 = vunpack.c.l.b16 %v139
    %v323 = vunpack.c.h.b16 %v139
    %v324 = vunpack.c.l.b16 %v140
    %v325 = vunpack.c.h.b16 %v140
    %v326 = vunpack.c.l.b16 %v141
    %v327 = vunpack.c.h.b16 %v141
    %v328 = vunpack.c.l.b16 %v142
    %v329 = vunpack.c.h.b16 %v142
    %v330 = vunpack.c.l.b16 %v143
    %v331 = vunpack.c.h.b16 %v143
    %v332 = vunpack.c.l.b16 %v144
    %v333 = vunpack.c.h.b16 %v144
    %v334 = vunpack.c.l.b16 %v145
    %v335 = vunpack.c.h.b16 %v145
    %v336 = vunpack.c.l.b16 %v146
    %v337 = vunpack.c.h.b16 %v146
    %v338 = vunpack.c.l.b16 %v147
    %v339 = vunpack.c.h.b16 %v147
    %v340 = vunpack.c.l.b16 %v148
    %v341 = vunpack.c.h.b16 %v148
    %v342 = vpack.c.b16 %v218, %v214
    %v343 = vpack.c.b16 %v219, %v215
    %v344 = vpack.c.b16 %v220, %v216
    %v345 = vpack.c.b16 %v221, %v217
    %v346 = vpack.c.b16 %v226, %v222
    %v347 = vpack.c.b16 %v227, %v223
    %v348 = vpack.c.b16 %v228, %v224
    %v349 = vpack.c.b16 %v229, %v225
    %v350 = vpack.c.b16 %v234, %v230
    %v351 = vpack.c.b16 %v235, %v231
    %v352 = vpack.c.b16 %v236, %v232
    %v353 = vpack.c.b16 %v237, %v233
    %v354 = vpack.c.b16 %v242, %v238
    %v355 = vpack.c.b16 %v243, %v239
    %v356 = vpack.c.b16 %v244, %v240
    %v357 = vpack.c.b16 %v245, %v241
    %v358 = vpack.c.b16 %v250, %v246
    %v359 = vpack.c.b16 %v251, %v247
    %v360 = vpack.c.b16 %v252, %v248
    %v361 = vpack.c.b16 %v253, %v249
    %v362 = vpack.c.b16 %v258, %v254
    %v363 = vpack.c.b16 %v259, %v255
    %v364 = vpack.c.b16 %v260, %v256
    %v365 = vpack.c.b16 %v261, %v257
    %v366 = vpack.c.b16 %v266, %v262
    %v367 = vpack.c.b16 %v267, %v263
    %v368 = vpack.c.b16 %v268, %v264
    %v369 = vpack.c.b16 %v269, %v265
    %v370 = vpack.c.b16 %v274, %v270
    %v371 = vpack.c.b16 %v275, %v271
    %v372 = vpack.c.b16 %v276, %v272
    %v373 = vpack.c.b16 %v277, %v273
    %v374 = vpack.c.b16 %v282, %v278
    %v375 = vpack.c.b16 %v283, %v279
    %v376 = vpack.c.b16 %v284, %v280
    %v377 = vpack.c.b16 %v285, %v281
    %v378 = vpack.c.b16 %v290, %v286
    %v379 = vpack.c.b16 %v291, %v287
    %v380 = vpack.c.b16 %v292, %v288
    %v381 = vpack.c.b16 %v293, %v289
    %v382 = vpack.c.b16 %v298, %v294
    %v383 = vpack.c.b16 %v299, %v295
    %v384 = vpack.c.b16 %v300, %v296
    %v385 = vpack.c.b16 %v301, %v297
    %v386 = vpack.c.b16 %v306, %v302
    %v387 = vpack.c.b16 %v307, %v303
    %v388 = vpack.c.b16 %v308, %v304
    %v389 = vpack.c.b16 %v309, %v305
    %v390 = vpack.c.b16 %v314, %v310
    %v391 = vpack.c.b16 %v315, %v311
    %v392 = vpack.c.b16 %v316, %v312
    %v393 = vpack.c.b16 %v317, %v313
    %v394 = vpack.c.b16 %v322, %v318
    %v395 = vpack.c.b16 %v323, %v319
    %v396 = vpack.c.b16 %v324, %v320
    %v397 = vpack.c.b16 %v325, %v321
    %v398 = vpack.c.b16 %v330, %v326
    %v399 = vpack.c.b16 %v331, %v327
    %v400 = vpack.c.b16 %v332, %v328
    %v401 = vpack.c.b16 %v333, %v329
    %v402 = vpack.c.b16 %v338, %v334
    %v403 = vpack.c.b16 %v339, %v335
    %v404 = vpack.c.b16 %v340, %v336
    %v405 = vpack.c.b16 %v341, %v337
    %v471 = vperm.slane %v149, 0
    %v472 = vperm.slane %v149, 1
    %v473 = vperm.slane %v149, 2
    %v474 = vperm.slane %v149, 3
    %479 = vmatpush.bf16.msra.mxu0 %v370
    %480 = vmatpush.bf16.msra.mxu0 %v366
    %481 = vmatpush.bf16.msra.mxu0 %v362
    %482 = vmatpush.bf16.msra.mxu0 %v358
    %483 = vmatpush.bf16.msra.mxu0 %v354
    %484 = vmatpush.bf16.msra.mxu0 %v350
    %485 = vmatpush.bf16.msra.mxu0 %v346
    %486 = vmatpush.bf16.msra.mxu0 %v342
    %487 = vmatmul.bf16.gmra.mxu0 %v83
    %v488 = vpop.f32.mrf.mxu0
    %v489 = vadd.f32 %v471, %v488
    %v490 = vpop.f32.mrf.mxu0
    %491 = vdwg.mxu0
    %492 = vmatpush.bf16.msra.mxu0 %v402
    %493 = vmatpush.bf16.msra.mxu0 %v398
    %494 = vmatpush.bf16.msra.mxu0 %v394
    %495 = vmatpush.bf16.msra.mxu0 %v390
    %496 = vmatpush.bf16.msra.mxu0 %v386
    %497 = vmatpush.bf16.msra.mxu0 %v382
    %498 = vmatpush.bf16.msra.mxu0 %v378
    %499 = vmatpush.bf16.msra.mxu0 %v374
    %500 = vmatmul.bf16.gmra.mxu0 %v84
    %v501 = vpop.f32.mrf.mxu0
    %v502 = vadd.f32 %v489, %v501
    %v503 = vpop.f32.mrf.mxu0
    %504 = vdwg.mxu0
    %505 = vmatpush.bf16.msra.mxu0 %v371
    %506 = vmatpush.bf16.msra.mxu0 %v367
    %507 = vmatpush.bf16.msra.mxu0 %v363
    %508 = vmatpush.bf16.msra.mxu0 %v359
    %509 = vmatpush.bf16.msra.mxu0 %v355
    %510 = vmatpush.bf16.msra.mxu0 %v351
    %511 = vmatpush.bf16.msra.mxu0 %v347
    %512 = vmatpush.bf16.msra.mxu0 %v343
    %513 = vmatmul.bf16.gmra.mxu0 %v83
    %v514 = vpop.f32.mrf.mxu0
    %v515 = vadd.f32 %v472, %v514
    %v516 = vpop.f32.mrf.mxu0
    %517 = vdwg.mxu0
    %518 = vmatpush.bf16.msra.mxu0 %v403
    %519 = vmatpush.bf16.msra.mxu0 %v399
    %520 = vmatpush.bf16.msra.mxu0 %v395
    %521 = vmatpush.bf16.msra.mxu0 %v391
    %522 = vmatpush.bf16.msra.mxu0 %v387
    %523 = vmatpush.bf16.msra.mxu0 %v383
    %524 = vmatpush.bf16.msra.mxu0 %v379
    %525 = vmatpush.bf16.msra.mxu0 %v375
    %526 = vmatmul.bf16.gmra.mxu0 %v84
    %v527 = vpop.f32.mrf.mxu0
    %v528 = vadd.f32 %v515, %v527
    %v529 = vpop.f32.mrf.mxu0
    %530 = vdwg.mxu0
    %531 = vmatpush.bf16.msra.mxu0 %v372
    %532 = vmatpush.bf16.msra.mxu0 %v368
    %533 = vmatpush.bf16.msra.mxu0 %v364
    %534 = vmatpush.bf16.msra.mxu0 %v360
    %535 = vmatpush.bf16.msra.mxu0 %v356
    %536 = vmatpush.bf16.msra.mxu0 %v352
    %537 = vmatpush.bf16.msra.mxu0 %v348
    %538 = vmatpush.bf16.msra.mxu0 %v344
    %539 = vmatmul.bf16.gmra.mxu0 %v83
    %v540 = vpop.f32.mrf.mxu0
    %v541 = vadd.f32 %v473, %v540
    %v542 = vpop.f32.mrf.mxu0
    %543 = vdwg.mxu0
    %544 = vmatpush.bf16.msra.mxu0 %v404
    %545 = vmatpush.bf16.msra.mxu0 %v400
    %546 = vmatpush.bf16.msra.mxu0 %v396
    %547 = vmatpush.bf16.msra.mxu0 %v392
    %548 = vmatpush.bf16.msra.mxu0 %v388
    %549 = vmatpush.bf16.msra.mxu0 %v384
    %550 = vmatpush.bf16.msra.mxu0 %v380
    %551 = vmatpush.bf16.msra.mxu0 %v376
    %552 = vmatmul.bf16.gmra.mxu0 %v84
    %v553 = vpop.f32.mrf.mxu0
    %v554 = vadd.f32 %v541, %v553
    %v555 = vpop.f32.mrf.mxu0
    %556 = vdwg.mxu0
    %557 = vmatpush.bf16.msra.mxu0 %v373
    %558 = vmatpush.bf16.msra.mxu0 %v369
    %559 = vmatpush.bf16.msra.mxu0 %v365
    %560 = vmatpush.bf16.msra.mxu0 %v361
    %561 = vmatpush.bf16.msra.mxu0 %v357
    %562 = vmatpush.bf16.msra.mxu0 %v353
    %563 = vmatpush.bf16.msra.mxu0 %v349
    %564 = vmatpush.bf16.msra.mxu0 %v345
    %565 = vmatmul.bf16.gmra.mxu0 %v83
    %v566 = vpop.f32.mrf.mxu0
    %v567 = vadd.f32 %v474, %v566
    %v568 = vpop.f32.mrf.mxu0
    %569 = vdwg.mxu0
    %570 = vmatpush.bf16.msra.mxu0 %v405
    %571 = vmatpush.bf16.msra.mxu0 %v401
    %572 = vmatpush.bf16.msra.mxu0 %v397
    %573 = vmatpush.bf16.msra.mxu0 %v393
    %574 = vmatpush.bf16.msra.mxu0 %v389
    %575 = vmatpush.bf16.msra.mxu0 %v385
    %576 = vmatpush.bf16.msra.mxu0 %v381
    %577 = vmatpush.bf16.msra.mxu0 %v377
    %578 = vmatmul.bf16.gmra.mxu0 %v84
    %v579 = vpop.f32.mrf.mxu0
    %v580 = vadd.f32 %v567, %v579
    %v581 = vpop.f32.mrf.mxu0
    %582 = vdwg.mxu0
    %v583 = vxor.u32 %v502, 2147483648
    %v584 = vmul.f32 %v583, 1.442695
    %v585 = vpow.pop %v584
    %v586 = vadd.f32 %v585, 1.0
    %v587 = vrcp.pop %v586
    %v588 = vmul.f32 %v586, %v587
    %v589 = vsub.f32 1.0, %v588
    %v590 = vmul.f32 %v587, %v589
    %v591 = vadd.f32 %v587, %v590
    %vm592 = vweird.f32 %v586
    %vm593 = vweird.f32 %v587
    %vm594 = vmor %vm592, %vm593
    %v595 = vsel %vm594, %v587, %v591
    %v596 = vand.u32 2147483647, %v586
    %vm597 = vcmp.eq.f32.partialorder %v596, 8.507059e+37
    %v598 = vand.u32 %v586, 2147483648
    %v599 = vor.u32 1.1754944e-38, %v598
    %v600 = vsel %vm597, %v599, %v595
    %v601 = vmul.f32 1.0, %v600
    %v602 = vxor.u32 %v528, 2147483648
    %v603 = vmul.f32 %v602, 1.442695
    %v604 = vpow.pop %v603
    %v605 = vadd.f32 %v604, 1.0
    %v606 = vrcp.pop %v605
    %v607 = vmul.f32 %v605, %v606
    %v608 = vsub.f32 1.0, %v607
    %v609 = vmul.f32 %v606, %v608
    %v610 = vadd.f32 %v606, %v609
    %vm611 = vweird.f32 %v605
    %vm612 = vweird.f32 %v606
    %vm613 = vmor %vm611, %vm612
    %v614 = vsel %vm613, %v606, %v610
    %v615 = vand.u32 2147483647, %v605
    %vm616 = vcmp.eq.f32.partialorder %v615, 8.507059e+37
    %v617 = vand.u32 %v605, 2147483648
    %v618 = vor.u32 1.1754944e-38, %v617
    %v619 = vsel %vm616, %v618, %v614
    %v620 = vmul.f32 1.0, %v619
    %v621 = vmul.f32 %v601, %v580
    %v622 = vadd.f32 %v554, %v621
    %v623 = vtanh.pop %v622
    %v624 = vsub.f32 1.0, %v620
    %v625 = vmul.f32 %v624, %v623
    %v626 = vmul.f32 %v620, %v81
    %v627 = vadd.f32 %v625, %v626
    %628 = vst [vmem:[#allocation2] sm:$0x1] %v627
    %629 = vst [vmem:[#allocation11] sm:$0x1] %v627
    %v630 = vpack.c.bf16 %v627, %v627
    %v631 = vld [vmem:[%s5] sm:$0xff]
    %v632 = vld [vmem:[%s5 + $0x8] sm:$0xff]
    %v633 = vld [vmem:[%s5 + $0x10] sm:$0xff]
    %v634 = vld [vmem:[%s5 + $0x18] sm:$0xff]
    %v635 = vld [vmem:[%s5 + $0x20] sm:$0xff]
    %v636 = vld [vmem:[%s5 + $0x28] sm:$0xff]
    %v637 = vld [vmem:[%s5 + $0x30] sm:$0xff]
    %v638 = vld [vmem:[%s5 + $0x38] sm:$0xff]
    %v639 = vld [vmem:[%s5 + $0x40] sm:$0xff]
    %v640 = vld [vmem:[%s5 + $0x48] sm:$0xff]
    %v641 = vld [vmem:[%s5 + $0x50] sm:$0xff]
    %v642 = vld [vmem:[%s5 + $0x58] sm:$0xff]
    %v643 = vld [vmem:[%s5 + $0x60] sm:$0xff]
    %v644 = vld [vmem:[%s5 + $0x68] sm:$0xff]
    %v645 = vld [vmem:[%s5 + $0x70] sm:$0xff]
    %v646 = vld [vmem:[%s5 + $0x78] sm:$0xff]
    %v647 = vld [vmem:[%s6] sm:$0x3]
    %v664 = vunpack.c.l.b16 %v631
    %v665 = vunpack.c.h.b16 %v631
    %v666 = vunpack.c.l.b16 %v632
    %v667 = vunpack.c.h.b16 %v632
    %v668 = vunpack.c.l.b16 %v633
    %v669 = vunpack.c.h.b16 %v633
    %v670 = vunpack.c.l.b16 %v634
    %v671 = vunpack.c.h.b16 %v634
    %v672 = vunpack.c.l.b16 %v635
    %v673 = vunpack.c.h.b16 %v635
    %v674 = vunpack.c.l.b16 %v636
    %v675 = vunpack.c.h.b16 %v636
    %v676 = vunpack.c.l.b16 %v637
    %v677 = vunpack.c.h.b16 %v637
    %v678 = vunpack.c.l.b16 %v638
    %v679 = vunpack.c.h.b16 %v638
    %v680 = vunpack.c.l.b16 %v639
    %v681 = vunpack.c.h.b16 %v639
    %v682 = vunpack.c.l.b16 %v640
    %v683 = vunpack.c.h.b16 %v640
    %v684 = vunpack.c.l.b16 %v641
    %v685 = vunpack.c.h.b16 %v641
    %v686 = vunpack.c.l.b16 %v642
    %v687 = vunpack.c.h.b16 %v642
    %v688 = vunpack.c.l.b16 %v643
    %v689 = vunpack.c.h.b16 %v643
    %v690 = vunpack.c.l.b16 %v644
    %v691 = vunpack.c.h.b16 %v644
    %v692 = vunpack.c.l.b16 %v645
    %v693 = vunpack.c.h.b16 %v645
    %v694 = vunpack.c.l.b16 %v646
    %v695 = vunpack.c.h.b16 %v646
    %v696 = vpack.c.b16 %v666, %v664
    %v697 = vpack.c.b16 %v667, %v665
    %v698 = vpack.c.b16 %v670, %v668
    %v699 = vpack.c.b16 %v671, %v669
    %v700 = vpack.c.b16 %v674, %v672
    %v701 = vpack.c.b16 %v675, %v673
    %v702 = vpack.c.b16 %v678, %v676
    %v703 = vpack.c.b16 %v679, %v677
    %v704 = vpack.c.b16 %v682, %v680
    %v705 = vpack.c.b16 %v683, %v681
    %v706 = vpack.c.b16 %v686, %v684
    %v707 = vpack.c.b16 %v687, %v685
    %v708 = vpack.c.b16 %v690, %v688
    %v709 = vpack.c.b16 %v691, %v689
    %v710 = vpack.c.b16 %v694, %v692
    %v711 = vpack.c.b16 %v695, %v693
    %v729 = vperm.slane %v647, 0
    %v730 = vperm.slane %v647, 1
    %733 = vmatpush.bf16.msra.mxu0 %v710
    %734 = vmatpush.bf16.msra.mxu0 %v708
    %735 = vmatpush.bf16.msra.mxu0 %v706
    %736 = vmatpush.bf16.msra.mxu0 %v704
    %737 = vmatpush.bf16.msra.mxu0 %v702
    %738 = vmatpush.bf16.msra.mxu0 %v700
    %739 = vmatpush.bf16.msra.mxu0 %v698
    %740 = vmatpush.bf16.msra.mxu0 %v696
    %741 = vmatmul.bf16.gmra.mxu0 %v630
    %v742 = vpop.f32.mrf.mxu0
    %v743 = vadd.f32 %v729, %v742
    %v744 = vpop.f32.mrf.mxu0
    %745 = vdwg.mxu0
    %746 = vmatpush.bf16.msra.mxu0 %v711
    %747 = vmatpush.bf16.msra.mxu0 %v709
    %748 = vmatpush.bf16.msra.mxu0 %v707
    %749 = vmatpush.bf16.msra.mxu0 %v705
    %750 = vmatpush.bf16.msra.mxu0 %v703
    %751 = vmatpush.bf16.msra.mxu0 %v701
    %752 = vmatpush.bf16.msra.mxu0 %v699
    %753 = vmatpush.bf16.msra.mxu0 %v697
    %754 = vmatmul.bf16.gmra.mxu0 %v630
    %v755 = vpop.f32.mrf.mxu0
    %v756 = vadd.f32 %v730, %v755
    %v757 = vpop.f32.mrf.mxu0
    %758 = vdwg.mxu0
    %vm759 = vcmask 1040384
    %v760 = vsel %vm759, %v743, -inf
    %v761 = vsel %vm759, %v756, -inf
    %v762 = vmax.f32 %v760, %v761
    %763 = vmax.xlane.f32.xlu0 %v762
    %v764 = vpop.xlane.xlu0 %763
    %v765 = vsub.f32 %v743, %v764
    %v766 = vsub.f32 %v756, %v764
    %v767 = vmul.f32 %v765, 1.442695
    %v768 = vpow.pop %v767
    %v769 = vmul.f32 %v766, 1.442695
    %v770 = vpow.pop %v769
    %v771 = vsel %vm759, %v768, 0.0
    %v772 = vsel %vm759, %v770, 0.0
    %v773 = vadd.f32 %v771, %v772
    %774 = vadd.xlane.f32.xlu0 %v773
    %v775 = vpop.xlane.xlu0 %774
    %v776 = vlog2.pop %v775
    %v777 = vmul.f32 %v776, 0.6931472
    %v778 = vadd.f32 %v764, %v777
    %v779 = vsub.f32 %v743, %v778
    %v780 = vsub.f32 %v756, %v778
    %v783 = vrot.slane %v780, 7
    %v784 = vsel %vm759, %v779, %v783
    %v786 = vlaneseq
    %vm787 = vcmp.ge.s32.totalorder %v786, 0
    %vm788 = vcmp.lt.s32.totalorder %v786, 256
    %vm789 = vmand %vm787, %vm788
    %790 = vst.msk [vmem:[#allocation10] sm:$0x3] %vm789, %v784
    // Predicated region
    $region38: #{tpu_custom_call.1} parent=1 // pred_check
      _
    $region39: #{tpu_custom_call.1} parent=1 // pred_check_branch
      %792 = sbr.rel (0) target = $region41
    $region40: #{tpu_custom_call.1} parent=1 // pred_region
      %794 = vsyncadd [#allocation7], 0
      %s796 = sshll.u32 [#allocation10], 4
      %s797 = int_to_ptr.vmem [resolvable:$true] %s796
      %s798 = sshll.u32 %s7, 4
      %s799 = int_to_ptr.hbm [resolvable:$true] %s798
      %801 = dma.vmem_to_hbm [thread:$0]  %s797, 32, %s799, [#allocation7]
    $region41: #{tpu_custom_call.1} parent=1 // pred_fallthru
      _
    // Predicated region
    $region42: #{tpu_custom_call.1} parent=1 // pred_check
      _
    $region43: #{tpu_custom_call.1} parent=1 // pred_check_branch
      %803 = sbr.rel (0) target = $region45
    $region44: #{tpu_custom_call.1} parent=1 // pred_region
      %805 = vsyncadd [#allocation12], 0
      %s807 = sshll.u32 [#allocation11], 4
      %s808 = int_to_ptr.vmem [resolvable:$true] %s807
      %s809 = sshll.u32 %s8, 4
      %s810 = int_to_ptr.hbm [resolvable:$true] %s809
      %812 = dma.vmem_to_hbm [thread:$0]  %s808, 16, %s810, [#allocation12]
    $region45: #{tpu_custom_call.1} parent=1 // pred_fallthru
      _
    // Predicated region
    $region46: #{tpu_custom_call.1} parent=1 // pred_check
      _
    $region47: #{tpu_custom_call.1} parent=1 // pred_check_branch
      %814 = sbr.rel (0) target = $region49
    $region48: #{tpu_custom_call.1} parent=1 // pred_region
      %816 = dma.done [#allocation7], 32
    $region49: #{tpu_custom_call.1} parent=1 // pred_fallthru
      _
    // Predicated region
    $region50: #{tpu_custom_call.1} parent=1 // pred_check
      _
    $region51: #{tpu_custom_call.1} parent=1 // pred_check_branch
      %818 = sbr.rel (0) target = $region53
    $region52: #{tpu_custom_call.1} parent=1 // pred_region
      %820 = dma.done [#allocation12], 16
    $region53: #{tpu_custom_call.1} parent=1 // pred_fallthru
      _
    %821 = vsyncpa [#allocation6], 1
    %822 = vsyncpa [#allocation9], 1
    %823 = vsyncpa [#allocation7], 1
    %824 = vsyncpa [#allocation12], 1

</llo_original>
